<compile_context>
chip_gen: v7x
topology: tpu7x:2x2x1
jax: 0.10.0
libtpu: 0.0.40
codegen_flags: <defaults>
</compile_context>

<pallas_src>
import functools

import jax
import jax.numpy as jnp
from jax.experimental import pallas as pl
from jax.experimental.pallas import tpu as pltpu


def _ce_label_smooth_kernel(logits_ref, targets_ref, out_ref, *,
                            epsilon, num_classes, batch_size, block_b):
    # logits_ref : (TB, C) model dtype, VMEM
    # targets_ref: (TB, 1) int32, VMEM
    # out_ref    : (8, 128) f32 partial-sum slab for this batch tile
    i = pl.program_id(0)

    logits = logits_ref[...].astype(jnp.float32)          # cast per tile, in VMEM
    tb, c = logits.shape

    # mask for padded rows in the last (partial) batch tile
    row_ids = jax.lax.broadcasted_iota(jnp.int32, (tb, 1), 0) + i * block_b
    valid = row_ids < batch_size                            # (TB, 1) bool

    # numerically-stable full logsumexp per row
    row_max = jnp.max(logits, axis=1, keepdims=True)        # (TB, 1)
    sumexp = jnp.sum(jnp.exp(logits - row_max), axis=1, keepdims=True)
    lse = row_max + jnp.log(sumexp)                         # (TB, 1)

    # gather logits[i, t_i] via 2D-iota compare (TPU needs >=2D iota); exactly one
    # class matches per valid row
    class_ids = jax.lax.broadcasted_iota(jnp.int32, (tb, c), 1)
    tgt = targets_ref[...]                                  # (TB, 1) int32
    tgt_logit = jnp.sum(jnp.where(class_ids == tgt, logits, 0.0),
                        axis=1, keepdims=True)              # (TB, 1)
    row_sum = jnp.sum(logits, axis=1, keepdims=True)        # (TB, 1)

    eps = epsilon
    # loss_i = sum_j (-smoothed_ij * log_probs_ij), rewritten without materializing
    # log_probs / onehot / smoothed:
    row_loss = (1.0 - eps) * (lse - tgt_logit) \
        + (eps / num_classes) * (num_classes * lse - row_sum)
    row_loss = jnp.where(valid, row_loss, 0.0)              # select -> padded garbage can't leak

    partial = jnp.sum(row_loss)                             # scalar partial sum for this tile

    # lane-dense (8,128) slab: partial in [0,0], zeros elsewhere (unmasked vst)
    slab_rows = jax.lax.broadcasted_iota(jnp.int32, (8, 128), 0)
    slab_cols = jax.lax.broadcasted_iota(jnp.int32, (8, 128), 1)
    out_ref[...] = jnp.where((slab_rows == 0) & (slab_cols == 0), partial, 0.0)


def _choose_block_b(B, C, itemsize, target_block_bytes=2 * 1024 * 1024):
    """Pick a batch-tile size: ~2 MiB logits block so 2 pipeline buffers stay well
    under the default scoped VMEM on every generation (16 MiB v5e / 32 MiB v6e,v7x)."""
    tb = target_block_bytes // max(1, C * itemsize)
    if tb >= B:
        return B                       # whole batch fits in one comfortable tile
    # multiple of 32 satisfies sublane tiling for f32 (8), bf16 (16) and int8 (32)
    tb = max(32, (int(tb) // 32) * 32)
    # TODO(synk): for vocab-scale C (row >> 64 KiB) also tile the class dimension with a
    # streaming/online logsumexp instead of growing the block here.
    return min(tb, B)


def cross_entropy_label_smooth(inputs, targets, num_classes, epsilon=0.1, block_b=None):
    """JAX/Pallas equivalent of CrossEntropyLabelSmooth.forward.

    inputs:  (B, C) logits (any float dtype; NOT upcast in the wrapper)
    targets: (B,)   int class labels
    returns: scalar float32 loss
    """
    B, C = inputs.shape
    assert C == num_classes
    targets_2d = targets.astype(jnp.int32).reshape(B, 1)

    itemsize = jnp.dtype(inputs.dtype).itemsize
    tb = int(block_b) if block_b is not None else _choose_block_b(B, C, itemsize)
    num_tiles = int(pl.cdiv(B, tb))

    kernel = functools.partial(
        _ce_label_smooth_kernel,
        epsilon=float(epsilon),
        num_classes=int(num_classes),
        batch_size=int(B),
        block_b=tb,
    )

    cost = pl.CostEstimate(
        flops=int(10 * B * C),
        transcendentals=int(B * C + B),
        bytes_accessed=int(B * C * itemsize + B * 4 + num_tiles * 8 * 128 * 4),
    )

    partials = pl.pallas_call(
        kernel,
        out_shape=jax.ShapeDtypeStruct((num_tiles * 8, 128), jnp.float32),
        grid_spec=pltpu.PrefetchScalarGridSpec(
            num_scalar_prefetch=0,
            grid=(num_tiles,),
            in_specs=[
                pl.BlockSpec((tb, C), lambda i: (i, 0)),
                pl.BlockSpec((tb, 1), lambda i: (i, 0)),
            ],
            out_specs=pl.BlockSpec((8, 128), lambda i: (i, 0)),
        ),
        compiler_params=pltpu.CompilerParams(
            dimension_semantics=("parallel",),   # independent batch tiles -> megacore on v7x
        ),
        cost_estimate=cost,
    )(inputs, targets_2d)

    # loss = (-smoothed * log_probs).mean(0).sum() == total_sum / B
    return jnp.sum(partials) / B


def _reference(inputs, targets, num_classes, epsilon=0.1):
    log_probs = jax.nn.log_softmax(inputs.astype(jnp.float32), axis=1)
    onehot = jax.nn.one_hot(targets, num_classes, dtype=jnp.float32)
    smoothed = (1.0 - epsilon) * onehot + epsilon / num_classes
    return jnp.sum(jnp.mean(-smoothed * log_probs, axis=0))


if __name__ == "__main__":
    key = jax.random.PRNGKey(0)

    # --- test 1: small f32, single tile -------------------------------------
    k1, k2, key = jax.random.split(key, 3)
    B1, C1, eps = 8, 32, 0.1
    logits1 = jax.random.normal(k1, (B1, C1), dtype=jnp.float32)
    labels1 = jax.random.randint(k2, (B1,), 0, C1, dtype=jnp.int32)
    loss1 = jax.block_until_ready(cross_entropy_label_smooth(logits1, labels1, C1, eps))
    ref1 = _reference(logits1, labels1, C1, eps)
    assert jnp.allclose(loss1, ref1, rtol=1e-5, atol=1e-5), (loss1, ref1)

    # --- test 2: multi-tile with a partial last tile (exercises row masking) --
    k1, k2, key = jax.random.split(key, 3)
    B2, C2 = 48, 128
    logits2 = jax.random.normal(k1, (B2, C2), dtype=jnp.float32)
    labels2 = jax.random.randint(k2, (B2,), 0, C2, dtype=jnp.int32)
    loss2 = jax.block_until_ready(
        cross_entropy_label_smooth(logits2, labels2, C2, eps, block_b=32))
    ref2 = _reference(logits2, labels2, C2, eps)
    assert jnp.allclose(loss2, ref2, rtol=1e-5, atol=1e-5), (loss2, ref2)

    # --- test 3: bf16 inputs stay bf16 through the DMA, cast in-kernel --------
    k1, k2, key = jax.random.split(key, 3)
    B3, C3 = 16, 256
    logits3 = jax.random.normal(k1, (B3, C3), dtype=jnp.float32).astype(jnp.bfloat16)
    labels3 = jax.random.randint(k2, (B3,), 0, C3, dtype=jnp.int32)
    loss3 = jax.block_until_ready(cross_entropy_label_smooth(logits3, labels3, C3, eps))
    ref3 = _reference(logits3, labels3, C3, eps)
    assert jnp.allclose(loss3, ref3, rtol=1e-4, atol=1e-4), (loss3, ref3)

    print("KERNEL_OK")
</pallas_src>

<mosaic_0001>
module attributes {stable_mosaic.version = 11 : i64} {
  func.func @_ce_label_smooth_kernel(%arg0: i32, %arg1: memref<8x32xf32, #tpu.memory_space<vmem>>, %arg2: memref<8x1xi32, #tpu.memory_space<vmem>>, %arg3: memref<8x128xf32, #tpu.memory_space<vmem>>) attributes {dimension_semantics = [#tpu.dimension_semantics<parallel>], iteration_bounds = array<i64: 1>, scalar_prefetch = 0 : i64, scratch_operands = 0 : i64, tpu.core_type = #tpu.core_type<tc>, window_params = [{transform_indices = @transform_0, window_bounds = array<i64: 8, 32>}, {transform_indices = @transform_1, window_bounds = array<i64: 8, 1>}, {transform_indices = @transform_2, window_bounds = array<i64: 8, 128>}]} {
    %c0 = arith.constant 0 : index
    %c0_0 = arith.constant 0 : index
    %0 = vector.load %arg1[%c0, %c0_0] : memref<8x32xf32, #tpu.memory_space<vmem>>, vector<8x32xf32>
    %1 = tpu.iota {dimensions = array<i32: 0>} : vector<8x1xi32>
    %c8_i32 = arith.constant 8 : i32
    %2 = arith.muli %arg0, %c8_i32 : i32
    %3 = vector.broadcast %2 : i32 to vector<8x1xi32>
    %4 = arith.addi %1, %3 : vector<8x1xi32>
    %c8_i32_1 = arith.constant 8 : i32
    %5 = vector.broadcast %c8_i32_1 : i32 to vector<8x1xi32>
    %6 = arith.cmpi slt, %4, %5 : vector<8x1xi32>
    %cst = arith.constant dense<0xFF800000> : vector<8xf32>
    %7 = vector.multi_reduction <maximumf>, %0, %cst [1] : vector<8x32xf32> to vector<8xf32>
    %8 = vector.shape_cast %7 : vector<8xf32> to vector<8x1xf32>
    %9 = vector.broadcast %8 : vector<8x1xf32> to vector<8x32xf32>
    %10 = arith.subf %0, %9 : vector<8x32xf32>
    %11 = math.exp %10 : vector<8x32xf32>
    %cst_2 = arith.constant dense<0.000000e+00> : vector<8xf32>
    %12 = vector.multi_reduction <add>, %11, %cst_2 [1] : vector<8x32xf32> to vector<8xf32>
    %13 = vector.shape_cast %12 : vector<8xf32> to vector<8x1xf32>
    %14 = math.log %13 : vector<8x1xf32>
    %15 = arith.addf %8, %14 : vector<8x1xf32>
    %16 = tpu.iota {dimensions = array<i32: 1>} : vector<8x32xi32>
    %c0_3 = arith.constant 0 : index
    %c0_4 = arith.constant 0 : index
    %17 = vector.load %arg2[%c0_3, %c0_4] : memref<8x1xi32, #tpu.memory_space<vmem>>, vector<8x1xi32>
    %18 = vector.broadcast %17 : vector<8x1xi32> to vector<8x32xi32>
    %19 = arith.cmpi eq, %16, %18 : vector<8x32xi32>
    %cst_5 = arith.constant 0.000000e+00 : f32
    %20 = vector.broadcast %cst_5 : f32 to vector<8x32xf32>
    %21 = arith.select %19, %0, %20 : vector<8x32xi1>, vector<8x32xf32>
    %cst_6 = arith.constant dense<0.000000e+00> : vector<8xf32>
    %22 = vector.multi_reduction <add>, %21, %cst_6 [1] : vector<8x32xf32> to vector<8xf32>
    %23 = vector.shape_cast %22 : vector<8xf32> to vector<8x1xf32>
    %cst_7 = arith.constant dense<0.000000e+00> : vector<8xf32>
    %24 = vector.multi_reduction <add>, %0, %cst_7 [1] : vector<8x32xf32> to vector<8xf32>
    %25 = vector.shape_cast %24 : vector<8xf32> to vector<8x1xf32>
    %26 = arith.subf %15, %23 : vector<8x1xf32>
    %cst_8 = arith.constant 0.899999976 : f32
    %27 = vector.broadcast %cst_8 : f32 to vector<8x1xf32>
    %28 = arith.mulf %27, %26 : vector<8x1xf32>
    %cst_9 = arith.constant 3.200000e+01 : f32
    %29 = vector.broadcast %cst_9 : f32 to vector<8x1xf32>
    %30 = arith.mulf %29, %15 : vector<8x1xf32>
    %31 = arith.subf %30, %25 : vector<8x1xf32>
    %cst_10 = arith.constant 3.125000e-03 : f32
    %32 = vector.broadcast %cst_10 : f32 to vector<8x1xf32>
    %33 = arith.mulf %32, %31 : vector<8x1xf32>
    %34 = arith.addf %28, %33 : vector<8x1xf32>
    %cst_11 = arith.constant 0.000000e+00 : f32
    %35 = vector.broadcast %cst_11 : f32 to vector<8x1xf32>
    %36 = arith.select %6, %34, %35 : vector<8x1xi1>, vector<8x1xf32>
    %37 = vector.shape_cast %36 : vector<8x1xf32> to vector<1x8x1xf32>
    %cst_12 = arith.constant dense<0.000000e+00> : vector<1xf32>
    %38 = vector.multi_reduction <add>, %37, %cst_12 [1, 2] : vector<1x8x1xf32> to vector<1xf32>
    %39 = vector.shape_cast %38 : vector<1xf32> to vector<1x1x1xf32>
    %40 = vector.extract %39[0, 0, 0] : f32 from vector<1x1x1xf32>
    %41 = tpu.iota {dimensions = array<i32: 0>} : vector<8x128xi32>
    %42 = tpu.iota {dimensions = array<i32: 1>} : vector<8x128xi32>
    %c0_i32 = arith.constant 0 : i32
    %43 = vector.broadcast %c0_i32 : i32 to vector<8x128xi32>
    %44 = arith.cmpi eq, %41, %43 : vector<8x128xi32>
    %c0_i32_13 = arith.constant 0 : i32
    %45 = vector.broadcast %c0_i32_13 : i32 to vector<8x128xi32>
    %46 = arith.cmpi eq, %42, %45 : vector<8x128xi32>
    %47 = arith.andi %44, %46 : vector<8x128xi1>
    %cst_14 = arith.constant 0.000000e+00 : f32
    %48 = vector.broadcast %40 : f32 to vector<8x128xf32>
    %49 = vector.broadcast %cst_14 : f32 to vector<8x128xf32>
    %50 = arith.select %47, %48, %49 : vector<8x128xi1>, vector<8x128xf32>
    %c0_15 = arith.constant 0 : index
    %c0_16 = arith.constant 0 : index
    %51 = vector.load %arg3[%c0_15, %c0_16] : memref<8x128xf32, #tpu.memory_space<vmem>>, vector<8x128xf32>
    tpu.vector_store %arg3[%c0_15, %c0_16], %50 {strides = array<i32>} : memref<8x128xf32, #tpu.memory_space<vmem>>, vector<8x128xf32>,
    return
  }
  func.func @transform_0(%arg0: i32) -> (i32, i32) {
    %c0_i32 = arith.constant 0 : i32
    %c0_i32_0 = arith.constant 0 : i32
    return %arg0, %c0_i32 : i32, i32
  }
  func.func @transform_1(%arg0: i32) -> (i32, i32) {
    %c0_i32 = arith.constant 0 : i32
    %c0_i32_0 = arith.constant 0 : i32
    return %arg0, %c0_i32 : i32, i32
  }
  func.func @transform_2(%arg0: i32) -> (i32, i32) {
    %c0_i32 = arith.constant 0 : i32
    %c0_i32_0 = arith.constant 0 : i32
    return %arg0, %c0_i32 : i32, i32
  }
}

</mosaic_0001>

<llo_original>
// kernel: tpu_custom_call.1
$region0: #{tpu_custom_call.1}
  #allocation0 [shape = 'u32[]', space=smem, size = 0x4, offset = 0x4, fixed_abs, tag = 'smem constant byte address 0x4 - core index']
  #allocation1 [shape = 'u32[144,128]{1,0:T(1,128)}', space=vmem, size = 0x12000, scoped, tag = 'internal scratch']
  %s0 = inlined_call_operand.vmem [shape: f32[8,32], index: 0, kind: input, shape index: {}]
  %s1 = inlined_call_operand.vmem [shape: s32[8,1], index: 1, kind: input, shape index: {}]
  %s2 = inlined_call_operand.hbm [shape: f32[8,128], index: 2, kind: output, shape index: {}]
  %s3 = sld [smem:[#allocation0]]
  $region18: #{tpu_custom_call.1} parent=0
    _
  %s5 = ssub.s32 1, %s3
  %s6 = scalar_select 0, %s5, %s3
  $region1: #{tpu_custom_call.1} parent=0
    #allocation2 [shape = 'u8[4096]{0}', space=vmem, size = 0x1000, scoped, tag = 'output window, operand 0, single buffered']
    #allocation3 [shape = 's32[1]{0}', space=sflag, size = 0x4, scoped, tag = 'scoped memory for tpu_custom_call.1']
    %7 = vsyncpa [#allocation3], 0
    // Predicated region
    $region2: #{tpu_custom_call.1} parent=1 // pred_check
      _
    $region3: #{tpu_custom_call.1} parent=1 // pred_check_branch
      %9 = sbr.rel (0) target = $region5
    $region4: #{tpu_custom_call.1} parent=1 // pred_region
      _
    $region5: #{tpu_custom_call.1} parent=1 // pred_fallthru
      _
    // Predicated region
    $region6: #{tpu_custom_call.1} parent=1 // pred_check
      _
    $region7: #{tpu_custom_call.1} parent=1 // pred_check_branch
      %11 = sbr.rel (0) target = $region9
    $region8: #{tpu_custom_call.1} parent=1 // pred_region
      _
    $region9: #{tpu_custom_call.1} parent=1 // pred_fallthru
      _
    %v12 = vld [vmem:[%s0] sm:$0xff]
    %v13 = vlaneseq
    %v14 = vshrl.u32 %v13, 7
    %s15 = smul.u32 0, 8
    %v16 = vstv %s15
    %v17 = vadd.s32 %v14, %v16
    %vm18 = vcmp.lt.s32.totalorder %v17, 8
    %vm19 = vcmask 261120
    %v20 = vsel %vm19, %v12, -inf
    %21 = vmax.xlane.f32.xlu0 %v20
    %v22 = vpop.xlane.xlu0 %21
    %v23 = vsub.f32 %v12, %v22
    %v24 = vmul.f32 %v23, 1.442695
    %v25 = vpow.pop %v24
    %v26 = vsel %vm19, %v25, 0.0
    %27 = vadd.xlane.f32.xlu0 %v26
    %v28 = vpop.xlane.xlu0 %27
    %v29 = vlog2.pop %v28
    %v30 = vmul.f32 %v29, 0.6931472
    %v31 = vadd.f32 %v22, %v30
    %v32 = vlaneseq
    %v33 = vand.u32 %v32, 127
    %v34 = vld [vmem:[%s1] sm:$0xff]
    %35 = vset.pattern.permute.xlu0 0
    %36 = vperm.xlu0 %35, %v34
    %v37 = vpop.permute.xlu0 %36
    %vm38 = vcmp.eq.s32.totalorder %v33, %v37
    %v39 = vsel %vm38, %v12, 0.0
    %v40 = vsel %vm19, %v39, 0.0
    %41 = vadd.xlane.f32.xlu0 %v40
    %v42 = vpop.xlane.xlu0 %41
    %v43 = vsel %vm19, %v12, 0.0
    %44 = vadd.xlane.f32.xlu0 %v43
    %v45 = vpop.xlane.xlu0 %44
    %v46 = vsub.f32 %v31, %v42
    %v47 = vmul.f32 %v46, 0.9
    %v48 = vmul.f32 %v31, 32.0
    %v49 = vsub.f32 %v48, %v45
    %v50 = vmul.f32 %v49, 0.003125
    %v51 = vadd.f32 %v47, %v50
    %v52 = vsel %vm18, %v51, 0.0
    %vm53 = vcmask 7168
    %v54 = vsel %vm53, %v52, 0.0
    %55 = vadd.xlane.f32.xlu0 %v54
    %v56 = vpop.xlane.xlu0 %55
    %v57 = vrot.slane %v56, 4
    %v58 = vadd.f32 %v56, %v57
    %v59 = vrot.slane %v58, 2
    %v60 = vadd.f32 %v58, %v59
    %v61 = vrot.slane %v60, 1
    %v62 = vadd.f32 %v60, %v61
    %s63 = vtos %v62
    %vm64 = vcmp.eq.s32.totalorder %v14, 0
    %vm65 = vcmp.eq.s32.totalorder %v33, 0
    %vm66 = vmand %vm64, %vm65
    %v67 = vstv %s63
    %v68 = vsel %vm66, %v67, 0.0
    %69 = vst [vmem:[#allocation2] sm:$0xff] %v68
    // Predicated region
    $region10: #{tpu_custom_call.1} parent=1 // pred_check
      _
    $region11: #{tpu_custom_call.1} parent=1 // pred_check_branch
      %71 = sbr.rel (0) target = $region13
    $region12: #{tpu_custom_call.1} parent=1 // pred_region
      %s73 = ssub.s32 128, 128
      %74 = vsyncadd [#allocation3], %s73
      %s76 = sshll.u32 [#allocation2], 4
      %s77 = int_to_ptr.vmem [resolvable:$true] %s76
      %79 = dma.vmem_to_hbm [thread:$0]  %s77, 128, %s2, [#allocation3]
    $region13: #{tpu_custom_call.1} parent=1 // pred_fallthru
      _
    // Predicated region
    $region14: #{tpu_custom_call.1} parent=1 // pred_check
      _
    $region15: #{tpu_custom_call.1} parent=1 // pred_check_branch
      %81 = sbr.rel (0) target = $region17
    $region16: #{tpu_custom_call.1} parent=1 // pred_region
      %82 = dma.done [#allocation3], 128
    $region17: #{tpu_custom_call.1} parent=1 // pred_fallthru
      _
    %83 = vsyncpa [#allocation3], 1

</llo_original>
